<compile_context>
chip_gen: v5e
topology: v5e:2x2
jax: 0.10.0
libtpu: 0.0.40
codegen_flags: <defaults>
</compile_context>

<pallas_src>
import functools

import jax
import jax.numpy as jnp
from jax.experimental import pallas as pl
from jax.experimental.pallas import tpu as pltpu


_SQRT_2_OVER_PI = 0.7978845608028654


def _gelu_tanh(x):
    # gelu_pytorch_tanh (SigLIP hidden_act)
    return 0.5 * x * (1.0 + jnp.tanh(_SQRT_2_OVER_PI * (x + 0.044715 * x * x * x)))


# ----------------------------------------------------------------------------
# Kernel A: fused KV projection + single-query (probe) attention pooling.
#   grid = (B, cdiv(T, TT));  B "parallel", T "arbitrary" (online softmax).
# ----------------------------------------------------------------------------
def _kv_pool_kernel(q_ref, x_ref, wkv_ref, bkv_ref, hmat_ref, o_ref,
                    m_sc, l_sc, acc_sc, *, hidden, seq_len, t_tile, needs_mask):
    t_idx = pl.program_id(1)

    @pl.when(t_idx == 0)
    def _():
        m_sc[...] = jnp.full_like(m_sc, -jnp.inf)
        l_sc[...] = jnp.zeros_like(l_sc)
        acc_sc[...] = jnp.zeros_like(acc_sc)

    x = x_ref[...]                                                 # (TT, C)
    if needs_mask:
        row = jax.lax.broadcasted_iota(jnp.int32, x.shape, 0) + t_idx * t_tile
        x = jnp.where(row < seq_len, x, 0.0)                       # keep pad rows finite

    # KV projection for this (batch, time) tile: bf16 MXU inputs, f32 accumulation.
    kv = jnp.dot(x.astype(jnp.bfloat16), wkv_ref[...],
                 preferred_element_type=jnp.float32) + bkv_ref[...]  # (TT, 2C) f32
    k = kv[:, :hidden]                                             # (TT, C)
    v = kv[:, hidden:]                                             # (TT, C)

    q = q_ref[...]                                                 # (1, C), scale folded in
    hmat = hmat_ref[...]                                           # (C, H) one-hot head map

    # Per-head scores s[t, h] = sum_{c in head h} q[c] * k[t, c]  (block-diagonal
    # contraction via a tiny matmul; stays full lane width, no per-head slicing).
    s = jnp.dot(k * q, hmat, preferred_element_type=jnp.float32)   # (TT, H)
    if needs_mask:
        srow = jax.lax.broadcasted_iota(jnp.int32, s.shape, 0) + t_idx * t_tile
        s = jnp.where(srow < seq_len, s, -jnp.inf)                 # exclude pad rows

    m_prev = m_sc[...]
    m_new = jnp.maximum(m_prev, jnp.max(s, axis=0, keepdims=True))  # (1, H)
    alpha = jnp.exp(m_prev - m_new)                                 # (1, H)
    p = jnp.exp(s - m_new)                                          # (TT, H)
    l_sc[...] = alpha * l_sc[...] + jnp.sum(p, axis=0, keepdims=True)

    # Broadcast per-head quantities back onto channels (contract the head axis).
    p_full = jax.lax.dot_general(p, hmat, (((1,), (1,)), ((), ())),
                                 preferred_element_type=jnp.float32)  # (TT, C)
    a_full = jax.lax.dot_general(alpha, hmat, (((1,), (1,)), ((), ())),
                                 preferred_element_type=jnp.float32)  # (1, C)
    acc_sc[...] = a_full * acc_sc[...] + jnp.sum(p_full * v, axis=0, keepdims=True)
    m_sc[...] = m_new

    @pl.when(t_idx == pl.num_programs(1) - 1)
    def _():
        d_full = jax.lax.dot_general(l_sc[...], hmat, (((1,), (1,)), ((), ())),
                                     preferred_element_type=jnp.float32)  # (1, C)
        o_ref[...] = (acc_sc[...] * pl.reciprocal(d_full, approx=False)).astype(o_ref.dtype)


def pallas_kv_attention_pool(q0, x, wkv_t, bkv, hmat, *, num_heads, t_tile=512):
    """q0 (1,C) f32 scaled probe query; x (B,T,C); wkv_t (C,2C) bf16; -> (B,C)."""
    B, T, C = x.shape
    TT = T if T <= t_tile else t_tile          # t_tile is a multiple of 8/16
    grid_t = pl.cdiv(T, TT)
    needs_mask = (T % TT) != 0

    kernel = functools.partial(_kv_pool_kernel, hidden=C, seq_len=T,
                               t_tile=TT, needs_mask=needs_mask)
    # TODO(synk): mark the constant-index weight/bias/hmat/q0 specs single-buffered
    # (pipeline_mode=pl.Buffered(1)) once buffer_count=1 is confirmed supported,
    # to halve their resident VMEM footprint.
    out = pl.pallas_call(
        kernel,
        out_shape=jax.ShapeDtypeStruct((B, 1, C), x.dtype),
        grid_spec=pltpu.PrefetchScalarGridSpec(
            num_scalar_prefetch=0,
            grid=(B, grid_t),
            in_specs=[
                pl.BlockSpec((1, C), lambda b, t: (0, 0)),             # q0 (resident)
                pl.BlockSpec((None, TT, C), lambda b, t: (b, t, 0)),   # x tile
                pl.BlockSpec((C, 2 * C), lambda b, t: (0, 0)),         # Wkv (resident)
                pl.BlockSpec((1, 2 * C), lambda b, t: (0, 0)),         # bkv
                pl.BlockSpec((C, num_heads), lambda b, t: (0, 0)),     # hmat one-hot
            ],
            out_specs=pl.BlockSpec((None, 1, C), lambda b, t: (b, 0, 0)),
            scratch_shapes=[
                pltpu.VMEM((1, num_heads), jnp.float32),   # running max
                pltpu.VMEM((1, num_heads), jnp.float32),   # running denom
                pltpu.VMEM((1, C), jnp.float32),           # running weighted sum
            ],
        ),
        compiler_params=pltpu.CompilerParams(
            dimension_semantics=("parallel", "arbitrary")),
    )(q0, x, wkv_t, bkv, hmat)
    return out.reshape(B, C)


# ----------------------------------------------------------------------------
# Kernel B: fused out_proj + residual + LayerNorm + MLP(gelu_tanh) + residual,
#   with the MLP intermediate dimension tiled (grid axis j, "arbitrary").
# ----------------------------------------------------------------------------
def _tail_kernel(x_ref, wo_ref, bo_ref, g_ref, b_ref, w1_ref, b1_ref, w2_ref, b2_ref,
                 o_ref, hn_sc, res_sc, acc_sc, *, eps):
    j = pl.program_id(1)

    @pl.when(j == 0)
    def _():
        x = x_ref[...].astype(jnp.bfloat16)                                   # (TB, C)
        h = jnp.dot(x, wo_ref[...], preferred_element_type=jnp.float32) + bo_ref[...]
        res_sc[...] = h
        mu = jnp.mean(h, axis=-1, keepdims=True)
        var = jnp.mean(jnp.square(h - mu), axis=-1, keepdims=True)
        hn = (h - mu) * jax.lax.rsqrt(var + eps)
        hn_sc[...] = (hn * g_ref[...] + b_ref[...]).astype(hn_sc.dtype)       # bf16
        acc_sc[...] = jnp.zeros_like(acc_sc)

    # fc1 slice (TB, TI) -> gelu -> accumulate fc2 partial (TI, C) into f32 acc.
    f = jnp.dot(hn_sc[...], w1_ref[...], preferred_element_type=jnp.float32) + b1_ref[...]
    f = _gelu_tanh(f)
    acc_sc[...] += jnp.dot(f.astype(jnp.bfloat16), w2_ref[...],
                           preferred_element_type=jnp.float32)

    @pl.when(j == pl.num_programs(1) - 1)
    def _():
        o_ref[...] = (res_sc[...] + acc_sc[...] + b2_ref[...]).astype(o_ref.dtype)


def pallas_attn_tail(x, wo_t, bo, gamma, beta, w1_t, b1, w2_t, b2, *,
                     eps, b_tile=256, ti=None):
    """x (B,C) pooled rows; weights pre-transposed to (K,N) bf16, biases f32."""
    B, C = x.shape
    I_pad = w1_t.shape[1]
    TI = I_pad if ti is None else ti
    TB = B if B <= b_tile else b_tile
    grid = (pl.cdiv(B, TB), I_pad // TI)

    rows = lambda i, j: (i, 0)
    rep = lambda i, j: (0, 0)
    return pl.pallas_call(
        functools.partial(_tail_kernel, eps=eps),
        out_shape=jax.ShapeDtypeStruct((B, C), x.dtype),
        grid_spec=pltpu.PrefetchScalarGridSpec(
            num_scalar_prefetch=0,
            grid=grid,
            in_specs=[
                pl.BlockSpec((TB, C), rows),                  # pooled attention rows
                pl.BlockSpec((C, C), rep),                    # out_proj weight (bf16)
                pl.BlockSpec((1, C), rep),                    # out_proj bias
                pl.BlockSpec((1, C), rep),                    # layernorm gamma
                pl.BlockSpec((1, C), rep),                    # layernorm beta
                pl.BlockSpec((C, TI), lambda i, j: (0, j)),   # fc1 weight slice (bf16)
                pl.BlockSpec((1, TI), lambda i, j: (0, j)),   # fc1 bias slice
                pl.BlockSpec((TI, C), lambda i, j: (j, 0)),   # fc2 weight slice (bf16)
                pl.BlockSpec((1, C), rep),                    # fc2 bias
            ],
            out_specs=pl.BlockSpec((TB, C), rows),
            scratch_shapes=[
                pltpu.VMEM((TB, C), jnp.bfloat16),   # LN output (fc1 input)
                pltpu.VMEM((TB, C), jnp.float32),    # residual
                pltpu.VMEM((TB, C), jnp.float32),    # fc2 accumulator
            ],
        ),
        compiler_params=pltpu.CompilerParams(
            dimension_semantics=("parallel", "arbitrary")),
    )(x, wo_t, bo, gamma, beta, w1_t, b1, w2_t, b2)


# ----------------------------------------------------------------------------
# Full module forward.
# ----------------------------------------------------------------------------
def siglip_mha_pooling_head(hidden_state, params, *, num_heads, eps=1e-6,
                            t_tile=512, b_tile=256, i_tile=512):
    """Forward of SiglipMultiheadAttentionPoolingHead.  Returns (B, C)."""
    B, T, C = hidden_state.shape
    head_dim = C // num_heads
    scale = head_dim ** (-0.5)

    in_w, in_b = params["in_proj_weight"], params["in_proj_bias"]

    # --- one-time parameter prep (plain JAX; tiny, params-only) ---------------
    # Probe q-projection (M=1 matmul) precomputed outside Pallas; softmax scale
    # folded into the query so the kernel never multiplies by it.
    q0 = (params["probe"].reshape(1, C) @ (in_w[:C].T * scale)
          + (in_b[:C] * scale)[None, :]).astype(jnp.float32)              # (1, C)

    wkv_t = in_w[C:].T.astype(jnp.bfloat16)                               # (C, 2C) [K|V]
    bkv = in_b[C:].reshape(1, 2 * C).astype(jnp.float32)

    # One-hot head-assignment matrix, built once and passed as a constant input
    # (hoisted out of the per-grid-step kernel body).
    hmat = (jnp.arange(C)[:, None] // head_dim
            == jnp.arange(num_heads)[None, :]).astype(jnp.float32)        # (C, H)

    wo_t = params["out_proj_weight"].T.astype(jnp.bfloat16)               # (C, C)
    bo = params["out_proj_bias"].reshape(1, C).astype(jnp.float32)
    gamma = params["ln_weight"].reshape(1, C).astype(jnp.float32)
    beta = params["ln_bias"].reshape(1, C).astype(jnp.float32)

    I = params["fc1_weight"].shape[0]
    TI = I if I <= i_tile else i_tile
    I_pad = ((I + TI - 1) // TI) * TI
    w1_t = params["fc1_weight"].T                                         # (C, I)
    b1 = params["fc1_bias"].reshape(1, I)
    w2_t = params["fc2_weight"].T                                         # (I, C)
    if I_pad != I:
        # Zero-pad the intermediate dim so every TI-slice is dense and valid
        # (zero fc1 cols -> gelu(0)=0, zero fc2 rows -> zero contribution).
        w1_t = jnp.pad(w1_t, ((0, 0), (0, I_pad - I)))
        b1 = jnp.pad(b1, ((0, 0), (0, I_pad - I)))
        w2_t = jnp.pad(w2_t, ((0, I_pad - I), (0, 0)))
    w1_t = w1_t.astype(jnp.bfloat16)
    b1 = b1.astype(jnp.float32)
    w2_t = w2_t.astype(jnp.bfloat16)
    b2 = params["fc2_bias"].reshape(1, C).astype(jnp.float32)

    # 1) Fused KV projection + attention pooling -> (B, C).  Wkv stays resident
    #    in VMEM, the kv tensor never touches HBM.
    attn = pallas_kv_attention_pool(q0, hidden_state, wkv_t, bkv, hmat,
                                    num_heads=num_heads, t_tile=t_tile)

    # 2) Fused out_proj + residual + LayerNorm + MLP + residual -> (B, C).
    out = pallas_attn_tail(attn, wo_t, bo, gamma, beta, w1_t, b1, w2_t, b2,
                           eps=eps, b_tile=b_tile, ti=TI)
    # torch returns hidden_state[:, 0]; pooled seq length is 1 so this IS it.
    return out


# ----------------------------------------------------------------------------
# Pure-JAX (f32) reference for sanity checking.
# ----------------------------------------------------------------------------
def reference(hidden_state, params, num_heads, eps=1e-6):
    B, T, C = hidden_state.shape
    D = C // num_heads
    scale = D ** (-0.5)
    in_w, in_b = params["in_proj_weight"], params["in_proj_bias"]
    probe = jnp.broadcast_to(params["probe"], (B, 1, C))
    q = probe @ in_w[:C].T + in_b[:C]
    k = hidden_state @ in_w[C:2 * C].T + in_b[C:2 * C]
    v = hidden_state @ in_w[2 * C:].T + in_b[2 * C:]
    q = q.reshape(B, 1, num_heads, D).transpose(0, 2, 1, 3)
    k = k.reshape(B, T, num_heads, D).transpose(0, 2, 1, 3)
    v = v.reshape(B, T, num_heads, D).transpose(0, 2, 1, 3)
    s = jnp.einsum("bhqd,bhkd->bhqk", q, k) * scale
    p = jax.nn.softmax(s, axis=-1)
    o = jnp.einsum("bhqk,bhkd->bhqd", p, v)
    o = o.transpose(0, 2, 1, 3).reshape(B, 1, C)
    o = o @ params["out_proj_weight"].T + params["out_proj_bias"]
    residual = o
    mu = jnp.mean(o, axis=-1, keepdims=True)
    var = jnp.mean(jnp.square(o - mu), axis=-1, keepdims=True)
    ln = (o - mu) * jax.lax.rsqrt(var + eps) * params["ln_weight"] + params["ln_bias"]
    h1 = _gelu_tanh(ln @ params["fc1_weight"].T + params["fc1_bias"])
    h2 = h1 @ params["fc2_weight"].T + params["fc2_bias"]
    return (residual + h2)[:, 0]


if __name__ == "__main__":
    # Small config consistent with the module: hidden=32, heads=4 (head_dim=8),
    # seq=8, batch=2, mlp intermediate=64.
    B, T, C, H = 2, 8, 32, 4
    I = 2 * C
    EPS = 1e-6

    key = jax.random.PRNGKey(0)
    ks = jax.random.split(key, 12)

    params = {
        "probe": jax.random.normal(ks[0], (1, 1, C), jnp.float32),
        "in_proj_weight": jax.random.normal(ks[1], (3 * C, C), jnp.float32) * 0.05,
        "in_proj_bias": jax.random.normal(ks[2], (3 * C,), jnp.float32) * 0.05,
        "out_proj_weight": jax.random.normal(ks[3], (C, C), jnp.float32) * 0.05,
        "out_proj_bias": jax.random.normal(ks[4], (C,), jnp.float32) * 0.05,
        "ln_weight": 1.0 + jax.random.normal(ks[5], (C,), jnp.float32) * 0.05,
        "ln_bias": jax.random.normal(ks[6], (C,), jnp.float32) * 0.05,
        "fc1_weight": jax.random.normal(ks[7], (I, C), jnp.float32) * 0.05,
        "fc1_bias": jax.random.normal(ks[8], (I,), jnp.float32) * 0.05,
        "fc2_weight": jax.random.normal(ks[9], (C, I), jnp.float32) * 0.05,
        "fc2_bias": jax.random.normal(ks[10], (C,), jnp.float32) * 0.05,
    }
    hidden_state = jax.random.normal(ks[11], (B, T, C), jnp.float32)

    fwd = jax.jit(functools.partial(siglip_mha_pooling_head, num_heads=H, eps=EPS))
    out = jax.block_until_ready(fwd(hidden_state, params))

    ref = reference(hidden_state, params, num_heads=H, eps=EPS)
    assert out.shape == (B, C)
    # bf16 MXU inputs (f32 accumulation) vs the all-f32 reference -> loosened tol.
    assert jnp.allclose(out, ref, atol=3e-2, rtol=3e-2), (
        f"mismatch vs reference, max abs err = {jnp.max(jnp.abs(out - ref))}")

    print("KERNEL_OK")
</pallas_src>

<mosaic_0001>
module attributes {stable_mosaic.version = 11 : i64} {
  func.func @_kv_pool_kernel(%arg0: i32, %arg1: i32, %arg2: memref<1x32xf32, #tpu.memory_space<vmem>>, %arg3: memref<1x8x32xf32, #tpu.memory_space<vmem>>, %arg4: memref<32x64xbf16, #tpu.memory_space<vmem>>, %arg5: memref<1x64xf32, #tpu.memory_space<vmem>>, %arg6: memref<32x4xf32, #tpu.memory_space<vmem>>, %arg7: memref<1x1x32xf32, #tpu.memory_space<vmem>>, %arg8: memref<1x4xf32, #tpu.memory_space<vmem>>, %arg9: memref<1x4xf32, #tpu.memory_space<vmem>>, %arg10: memref<1x32xf32, #tpu.memory_space<vmem>>) attributes {dimension_semantics = [#tpu.dimension_semantics<parallel>, #tpu.dimension_semantics<arbitrary>], iteration_bounds = array<i64: 2, 1>, scalar_prefetch = 0 : i64, scratch_operands = 3 : i64, tpu.core_type = #tpu.core_type<tc>, window_params = [{pipeline_mode = #tpu.pipeline_mode<synchronous>, transform_indices = @transform_0, window_bounds = array<i64: 1, 32>}, {transform_indices = @transform_1, window_bounds = array<i64: 1, 8, 32>}, {pipeline_mode = #tpu.pipeline_mode<synchronous>, transform_indices = @transform_2, window_bounds = array<i64: 32, 64>}, {pipeline_mode = #tpu.pipeline_mode<synchronous>, transform_indices = @transform_3, window_bounds = array<i64: 1, 64>}, {pipeline_mode = #tpu.pipeline_mode<synchronous>, transform_indices = @transform_4, window_bounds = array<i64: 32, 4>}, {transform_indices = @transform_5, window_bounds = array<i64: 1, 1, 32>}]} {
    %c0_i32 = arith.constant 0 : i32
    %0 = arith.cmpi eq, %arg1, %c0_i32 : i32
    %1 = arith.extui %0 : i1 to i32
    %c0_i32_0 = arith.constant 0 : i32
    %2 = arith.cmpi ne, %1, %c0_i32_0 : i32
    scf.if %2 {
      %cst_31 = arith.constant 0xFF800000 : f32
      %46 = vector.broadcast %cst_31 : f32 to vector<1x4xf32>
      %c0_32 = arith.constant 0 : index
      %c0_33 = arith.constant 0 : index
      %47 = vector.load %arg8[%c0_32, %c0_33] : memref<1x4xf32, #tpu.memory_space<vmem>>, vector<1x4xf32>
      tpu.vector_store %arg8[%c0_32, %c0_33], %46 {strides = array<i32>} : memref<1x4xf32, #tpu.memory_space<vmem>>, vector<1x4xf32>,
      %cst_34 = arith.constant 0.000000e+00 : f32
      %48 = vector.broadcast %cst_34 : f32 to vector<1x4xf32>
      %c0_35 = arith.constant 0 : index
      %c0_36 = arith.constant 0 : index
      %49 = vector.load %arg9[%c0_35, %c0_36] : memref<1x4xf32, #tpu.memory_space<vmem>>, vector<1x4xf32>
      tpu.vector_store %arg9[%c0_35, %c0_36], %48 {strides = array<i32>} : memref<1x4xf32, #tpu.memory_space<vmem>>, vector<1x4xf32>,
      %cst_37 = arith.constant 0.000000e+00 : f32
      %50 = vector.broadcast %cst_37 : f32 to vector<1x32xf32>
      %c0_38 = arith.constant 0 : index
      %c0_39 = arith.constant 0 : index
      %51 = vector.load %arg10[%c0_38, %c0_39] : memref<1x32xf32, #tpu.memory_space<vmem>>, vector<1x32xf32>
      tpu.vector_store %arg10[%c0_38, %c0_39], %50 {strides = array<i32>} : memref<1x32xf32, #tpu.memory_space<vmem>>, vector<1x32xf32>,
    } else {
    }
    %c0 = arith.constant 0 : index
    %c0_1 = arith.constant 0 : index
    %c0_2 = arith.constant 0 : index
    %3 = vector.load %arg3[%c0, %c0_1, %c0_2] : memref<1x8x32xf32, #tpu.memory_space<vmem>>, vector<1x8x32xf32>
    %4 = vector.shape_cast %3 : vector<1x8x32xf32> to vector<8x32xf32>
    %5 = arith.truncf %4 : vector<8x32xf32> to vector<8x32xbf16>
    %c0_3 = arith.constant 0 : index
    %c0_4 = arith.constant 0 : index
    %6 = vector.load %arg4[%c0_3, %c0_4] : memref<32x64xbf16, #tpu.memory_space<vmem>>, vector<32x64xbf16>
    %cst = arith.constant dense<0.000000e+00> : vector<8x64xf32>
    %7 = tpu.matmul %5, %6, %cst {dimension_numbers = #tpu.dot_dimension_numbers<[1], [0], [0], [1], [0, 0, 1, 1], [], []>} : vector<8x32xbf16>, vector<32x64xbf16>, vector<8x64xf32> -> vector<8x64xf32>
    %c0_5 = arith.constant 0 : index
    %c0_6 = arith.constant 0 : index
    %8 = vector.load %arg5[%c0_5, %c0_6] : memref<1x64xf32, #tpu.memory_space<vmem>>, vector<1x64xf32>
    %9 = vector.broadcast %8 : vector<1x64xf32> to vector<8x64xf32>
    %10 = arith.addf %7, %9 : vector<8x64xf32>
    %11 = vector.extract_strided_slice %10 {offsets = [0, 0], sizes = [8, 32], strides = [1, 1]} : vector<8x64xf32> to vector<8x32xf32>
    %12 = vector.extract_strided_slice %10 {offsets = [0, 32], sizes = [8, 32], strides = [1, 1]} : vector<8x64xf32> to vector<8x32xf32>
    %c0_7 = arith.constant 0 : index
    %c0_8 = arith.constant 0 : index
    %13 = vector.load %arg2[%c0_7, %c0_8] : memref<1x32xf32, #tpu.memory_space<vmem>>, vector<1x32xf32>
    %c0_9 = arith.constant 0 : index
    %c0_10 = arith.constant 0 : index
    %14 = vector.load %arg6[%c0_9, %c0_10] : memref<32x4xf32, #tpu.memory_space<vmem>>, vector<32x4xf32>
    %15 = vector.broadcast %13 : vector<1x32xf32> to vector<8x32xf32>
    %16 = arith.mulf %11, %15 : vector<8x32xf32>
    %cst_11 = arith.constant dense<0.000000e+00> : vector<8x4xf32>
    %17 = tpu.matmul %16, %14, %cst_11 {dimension_numbers = #tpu.dot_dimension_numbers<[1], [0], [0], [1], [0, 0, 1, 1], [], []>} : vector<8x32xf32>, vector<32x4xf32>, vector<8x4xf32> -> vector<8x4xf32>
    %c0_12 = arith.constant 0 : index
    %c0_13 = arith.constant 0 : index
    %18 = vector.load %arg8[%c0_12, %c0_13] : memref<1x4xf32, #tpu.memory_space<vmem>>, vector<1x4xf32>
    %cst_14 = arith.constant dense<0xFF800000> : vector<4xf32>
    %19 = vector.multi_reduction <maximumf>, %17, %cst_14 [0] : vector<8x4xf32> to vector<4xf32>
    %20 = vector.shape_cast %19 : vector<4xf32> to vector<1x4xf32>
    %21 = arith.maximumf %18, %20 : vector<1x4xf32>
    %22 = arith.subf %18, %21 : vector<1x4xf32>
    %23 = math.exp %22 : vector<1x4xf32>
    %24 = vector.broadcast %21 : vector<1x4xf32> to vector<8x4xf32>
    %25 = arith.subf %17, %24 : vector<8x4xf32>
    %26 = math.exp %25 : vector<8x4xf32>
    %c0_15 = arith.constant 0 : index
    %c0_16 = arith.constant 0 : index
    %27 = vector.load %arg9[%c0_15, %c0_16] : memref<1x4xf32, #tpu.memory_space<vmem>>, vector<1x4xf32>
    %28 = arith.mulf %23, %27 : vector<1x4xf32>
    %cst_17 = arith.constant dense<0.000000e+00> : vector<4xf32>
    %29 = vector.multi_reduction <add>, %26, %cst_17 [0] : vector<8x4xf32> to vector<4xf32>
    %30 = vector.shape_cast %29 : vector<4xf32> to vector<1x4xf32>
    %31 = arith.addf %28, %30 : vector<1x4xf32>
    %c0_18 = arith.constant 0 : index
    %c0_19 = arith.constant 0 : index
    %32 = vector.load %arg9[%c0_18, %c0_19] : memref<1x4xf32, #tpu.memory_space<vmem>>, vector<1x4xf32>
    tpu.vector_store %arg9[%c0_18, %c0_19], %31 {strides = array<i32>} : memref<1x4xf32, #tpu.memory_space<vmem>>, vector<1x4xf32>,
    %cst_20 = arith.constant dense<0.000000e+00> : vector<8x32xf32>
    %33 = tpu.matmul %26, %14, %cst_20 {dimension_numbers = #tpu.dot_dimension_numbers<[1], [1], [0], [0], [0, 0, 1, 0], [], []>} : vector<8x4xf32>, vector<32x4xf32>, vector<8x32xf32> -> vector<8x32xf32>
    %cst_21 = arith.constant dense<0.000000e+00> : vector<1x32xf32>
    %34 = tpu.matmul %23, %14, %cst_21 {dimension_numbers = #tpu.dot_dimension_numbers<[1], [1], [0], [0], [0, 0, 1, 0], [], []>} : vector<1x4xf32>, vector<32x4xf32>, vector<1x32xf32> -> vector<1x32xf32>
    %c0_22 = arith.constant 0 : index
    %c0_23 = arith.constant 0 : index
    %35 = vector.load %arg10[%c0_22, %c0_23] : memref<1x32xf32, #tpu.memory_space<vmem>>, vector<1x32xf32>
    %36 = arith.mulf %34, %35 : vector<1x32xf32>
    %37 = arith.mulf %33, %12 : vector<8x32xf32>
    %cst_24 = arith.constant dense<0.000000e+00> : vector<32xf32>
    %38 = vector.multi_reduction <add>, %37, %cst_24 [0] : vector<8x32xf32> to vector<32xf32>
    %39 = vector.shape_cast %38 : vector<32xf32> to vector<1x32xf32>
    %40 = arith.addf %36, %39 : vector<1x32xf32>
    %c0_25 = arith.constant 0 : index
    %c0_26 = arith.constant 0 : index
    %41 = vector.load %arg10[%c0_25, %c0_26] : memref<1x32xf32, #tpu.memory_space<vmem>>, vector<1x32xf32>
    tpu.vector_store %arg10[%c0_25, %c0_26], %40 {strides = array<i32>} : memref<1x32xf32, #tpu.memory_space<vmem>>, vector<1x32xf32>,
    %c0_27 = arith.constant 0 : index
    %c0_28 = arith.constant 0 : index
    %42 = vector.load %arg8[%c0_27, %c0_28] : memref<1x4xf32, #tpu.memory_space<vmem>>, vector<1x4xf32>
    tpu.vector_store %arg8[%c0_27, %c0_28], %21 {strides = array<i32>} : memref<1x4xf32, #tpu.memory_space<vmem>>, vector<1x4xf32>,
    %c0_i32_29 = arith.constant 0 : i32
    %43 = arith.cmpi eq, %arg1, %c0_i32_29 : i32
    %44 = arith.extui %43 : i1 to i32
    %c0_i32_30 = arith.constant 0 : i32
    %45 = arith.cmpi ne, %44, %c0_i32_30 : i32
    scf.if %45 {
      %c0_31 = arith.constant 0 : index
      %c0_32 = arith.constant 0 : index
      %46 = vector.load %arg9[%c0_31, %c0_32] : memref<1x4xf32, #tpu.memory_space<vmem>>, vector<1x4xf32>
      %cst_33 = arith.constant dense<0.000000e+00> : vector<1x32xf32>
      %47 = tpu.matmul %46, %14, %cst_33 {dimension_numbers = #tpu.dot_dimension_numbers<[1], [1], [0], [0], [0, 0, 1, 0], [], []>} : vector<1x4xf32>, vector<32x4xf32>, vector<1x32xf32> -> vector<1x32xf32>
      %c0_34 = arith.constant 0 : index
      %c0_35 = arith.constant 0 : index
      %48 = vector.load %arg10[%c0_34, %c0_35] : memref<1x32xf32, #tpu.memory_space<vmem>>, vector<1x32xf32>
      %49 = tpu.reciprocal %47 : vector<1x32xf32> -> vector<1x32xf32>
      %50 = arith.mulf %48, %49 : vector<1x32xf32>
      %c0_36 = arith.constant 0 : index
      %c0_37 = arith.constant 0 : index
      %c0_38 = arith.constant 0 : index
      %51 = vector.load %arg7[%c0_36, %c0_37, %c0_38] : memref<1x1x32xf32, #tpu.memory_space<vmem>>, vector<1x1x32xf32>
      %52 = vector.shape_cast %51 : vector<1x1x32xf32> to vector<1x32xf32>
      %53 = vector.shape_cast %50 : vector<1x32xf32> to vector<1x1x32xf32>
      tpu.vector_store %arg7[%c0_36, %c0_37, %c0_38], %53 {strides = array<i32>} : memref<1x1x32xf32, #tpu.memory_space<vmem>>, vector<1x1x32xf32>,
    } else {
    }
    return
  }
  func.func @transform_0(%arg0: i32, %arg1: i32) -> (i32, i32) {
    %c0_i32 = arith.constant 0 : i32
    %c0_i32_0 = arith.constant 0 : i32
    %c0_i32_1 = arith.constant 0 : i32
    return %c0_i32, %c0_i32_0 : i32, i32
  }
  func.func @transform_1(%arg0: i32, %arg1: i32) -> (i32, i32, i32) {
    %c0_i32 = arith.constant 0 : i32
    %c0_i32_0 = arith.constant 0 : i32
    return %arg0, %arg1, %c0_i32 : i32, i32, i32
  }
  func.func @transform_2(%arg0: i32, %arg1: i32) -> (i32, i32) {
    %c0_i32 = arith.constant 0 : i32
    %c0_i32_0 = arith.constant 0 : i32
    %c0_i32_1 = arith.constant 0 : i32
    return %c0_i32, %c0_i32_0 : i32, i32
  }
  func.func @transform_3(%arg0: i32, %arg1: i32) -> (i32, i32) {
    %c0_i32 = arith.constant 0 : i32
    %c0_i32_0 = arith.constant 0 : i32
    %c0_i32_1 = arith.constant 0 : i32
    return %c0_i32, %c0_i32_0 : i32, i32
  }
  func.func @transform_4(%arg0: i32, %arg1: i32) -> (i32, i32) {
    %c0_i32 = arith.constant 0 : i32
    %c0_i32_0 = arith.constant 0 : i32
    %c0_i32_1 = arith.constant 0 : i32
    return %c0_i32, %c0_i32_0 : i32, i32
  }
  func.func @transform_5(%arg0: i32, %arg1: i32) -> (i32, i32, i32) {
    %c0_i32 = arith.constant 0 : i32
    %c0_i32_0 = arith.constant 0 : i32
    %c0_i32_1 = arith.constant 0 : i32
    return %arg0, %c0_i32, %c0_i32_0 : i32, i32, i32
  }
}

module attributes {stable_mosaic.version = 11 : i64} {
  func.func @_tail_kernel(%arg0: i32, %arg1: i32, %arg2: memref<2x32xf32, #tpu.memory_space<vmem>>, %arg3: memref<32x32xbf16, #tpu.memory_space<vmem>>, %arg4: memref<1x32xf32, #tpu.memory_space<vmem>>, %arg5: memref<1x32xf32, #tpu.memory_space<vmem>>, %arg6: memref<1x32xf32, #tpu.memory_space<vmem>>, %arg7: memref<32x64xbf16, #tpu.memory_space<vmem>>, %arg8: memref<1x64xf32, #tpu.memory_space<vmem>>, %arg9: memref<64x32xbf16, #tpu.memory_space<vmem>>, %arg10: memref<1x32xf32, #tpu.memory_space<vmem>>, %arg11: memref<2x32xf32, #tpu.memory_space<vmem>>, %arg12: memref<2x32xbf16, #tpu.memory_space<vmem>>, %arg13: memref<2x32xf32, #tpu.memory_space<vmem>>, %arg14: memref<2x32xf32, #tpu.memory_space<vmem>>) attributes {dimension_semantics = [#tpu.dimension_semantics<parallel>, #tpu.dimension_semantics<arbitrary>], iteration_bounds = array<i64: 1, 1>, scalar_prefetch = 0 : i64, scratch_operands = 3 : i64, tpu.core_type = #tpu.core_type<tc>, window_params = [{transform_indices = @transform_0, window_bounds = array<i64: 2, 32>}, {pipeline_mode = #tpu.pipeline_mode<synchronous>, transform_indices = @transform_1, window_bounds = array<i64: 32, 32>}, {pipeline_mode = #tpu.pipeline_mode<synchronous>, transform_indices = @transform_2, window_bounds = array<i64: 1, 32>}, {pipeline_mode = #tpu.pipeline_mode<synchronous>, transform_indices = @transform_3, window_bounds = array<i64: 1, 32>}, {pipeline_mode = #tpu.pipeline_mode<synchronous>, transform_indices = @transform_4, window_bounds = array<i64: 1, 32>}, {transform_indices = @transform_5, window_bounds = array<i64: 32, 64>}, {transform_indices = @transform_6, window_bounds = array<i64: 1, 64>}, {transform_indices = @transform_7, window_bounds = array<i64: 64, 32>}, {pipeline_mode = #tpu.pipeline_mode<synchronous>, transform_indices = @transform_8, window_bounds = array<i64: 1, 32>}, {transform_indices = @transform_9, window_bounds = array<i64: 2, 32>}]} {
    %c0_i32 = arith.constant 0 : i32
    %0 = arith.cmpi eq, %arg1, %c0_i32 : i32
    %1 = arith.extui %0 : i1 to i32
    %c0_i32_0 = arith.constant 0 : i32
    %2 = arith.cmpi ne, %1, %c0_i32_0 : i32
    scf.if %2 {
      %c0_19 = arith.constant 0 : index
      %c0_20 = arith.constant 0 : index
      %31 = vector.load %arg2[%c0_19, %c0_20] : memref<2x32xf32, #tpu.memory_space<vmem>>, vector<2x32xf32>
      %32 = arith.truncf %31 : vector<2x32xf32> to vector<2x32xbf16>
      %c0_21 = arith.constant 0 : index
      %c0_22 = arith.constant 0 : index
      %33 = vector.load %arg3[%c0_21, %c0_22] : memref<32x32xbf16, #tpu.memory_space<vmem>>, vector<32x32xbf16>
      %cst_23 = arith.constant dense<0.000000e+00> : vector<2x32xf32>
      %34 = tpu.matmul %32, %33, %cst_23 {dimension_numbers = #tpu.dot_dimension_numbers<[1], [0], [0], [1], [0, 0, 1, 1], [], []>} : vector<2x32xbf16>, vector<32x32xbf16>, vector<2x32xf32> -> vector<2x32xf32>
      %c0_24 = arith.constant 0 : index
      %c0_25 = arith.constant 0 : index
      %35 = vector.load %arg4[%c0_24, %c0_25] : memref<1x32xf32, #tpu.memory_space<vmem>>, vector<1x32xf32>
      %36 = vector.broadcast %35 : vector<1x32xf32> to vector<2x32xf32>
      %37 = arith.addf %34, %36 : vector<2x32xf32>
      %c0_26 = arith.constant 0 : index
      %c0_27 = arith.constant 0 : index
      %38 = vector.load %arg13[%c0_26, %c0_27] : memref<2x32xf32, #tpu.memory_space<vmem>>, vector<2x32xf32>
      tpu.vector_store %arg13[%c0_26, %c0_27], %37 {strides = array<i32>} : memref<2x32xf32, #tpu.memory_space<vmem>>, vector<2x32xf32>,
      %cst_28 = arith.constant dense<0.000000e+00> : vector<2xf32>
      %39 = vector.multi_reduction <add>, %37, %cst_28 [1] : vector<2x32xf32> to vector<2xf32>
      %40 = vector.shape_cast %39 : vector<2xf32> to vector<2x1xf32>
      %cst_29 = arith.constant 3.200000e+01 : f32
      %41 = vector.broadcast %cst_29 : f32 to vector<2x1xf32>
      %42 = arith.divf %40, %41 : vector<2x1xf32>
      %43 = vector.broadcast %42 : vector<2x1xf32> to vector<2x32xf32>
      %44 = arith.subf %37, %43 : vector<2x32xf32>
      %45 = arith.mulf %44, %44 : vector<2x32xf32>
      %cst_30 = arith.constant dense<0.000000e+00> : vector<2xf32>
      %46 = vector.multi_reduction <add>, %45, %cst_30 [1] : vector<2x32xf32> to vector<2xf32>
      %47 = vector.shape_cast %46 : vector<2xf32> to vector<2x1xf32>
      %cst_31 = arith.constant 3.200000e+01 : f32
      %48 = vector.broadcast %cst_31 : f32 to vector<2x1xf32>
      %49 = arith.divf %47, %48 : vector<2x1xf32>
      %50 = vector.broadcast %42 : vector<2x1xf32> to vector<2x32xf32>
      %51 = arith.subf %37, %50 : vector<2x32xf32>
      %cst_32 = arith.constant 9.99999997E-7 : f32
      %52 = vector.broadcast %cst_32 : f32 to vector<2x1xf32>
      %53 = arith.addf %49, %52 : vector<2x1xf32>
      %54 = math.rsqrt %53 : vector<2x1xf32>
      %55 = vector.broadcast %54 : vector<2x1xf32> to vector<2x32xf32>
      %56 = arith.mulf %51, %55 : vector<2x32xf32>
      %c0_33 = arith.constant 0 : index
      %c0_34 = arith.constant 0 : index
      %57 = vector.load %arg5[%c0_33, %c0_34] : memref<1x32xf32, #tpu.memory_space<vmem>>, vector<1x32xf32>
      %58 = vector.broadcast %57 : vector<1x32xf32> to vector<2x32xf32>
      %59 = arith.mulf %56, %58 : vector<2x32xf32>
      %c0_35 = arith.constant 0 : index
      %c0_36 = arith.constant 0 : index
      %60 = vector.load %arg6[%c0_35, %c0_36] : memref<1x32xf32, #tpu.memory_space<vmem>>, vector<1x32xf32>
      %61 = vector.broadcast %60 : vector<1x32xf32> to vector<2x32xf32>
      %62 = arith.addf %59, %61 : vector<2x32xf32>
      %63 = arith.truncf %62 : vector<2x32xf32> to vector<2x32xbf16>
      %c0_37 = arith.constant 0 : index
      %c0_38 = arith.constant 0 : index
      %64 = vector.load %arg12[%c0_37, %c0_38] : memref<2x32xbf16, #tpu.memory_space<vmem>>, vector<2x32xbf16>
      tpu.vector_store %arg12[%c0_37, %c0_38], %63 {strides = array<i32>} : memref<2x32xbf16, #tpu.memory_space<vmem>>, vector<2x32xbf16>,
      %cst_39 = arith.constant 0.000000e+00 : f32
      %65 = vector.broadcast %cst_39 : f32 to vector<2x32xf32>
      %c0_40 = arith.constant 0 : index
      %c0_41 = arith.constant 0 : index
      %66 = vector.load %arg14[%c0_40, %c0_41] : memref<2x32xf32, #tpu.memory_space<vmem>>, vector<2x32xf32>
      tpu.vector_store %arg14[%c0_40, %c0_41], %65 {strides = array<i32>} : memref<2x32xf32, #tpu.memory_space<vmem>>, vector<2x32xf32>,
    } else {
    }
    %c0 = arith.constant 0 : index
    %c0_1 = arith.constant 0 : index
    %3 = vector.load %arg12[%c0, %c0_1] : memref<2x32xbf16, #tpu.memory_space<vmem>>, vector<2x32xbf16>
    %c0_2 = arith.constant 0 : index
    %c0_3 = arith.constant 0 : index
    %4 = vector.load %arg7[%c0_2, %c0_3] : memref<32x64xbf16, #tpu.memory_space<vmem>>, vector<32x64xbf16>
    %cst = arith.constant dense<0.000000e+00> : vector<2x64xf32>
    %5 = tpu.matmul %3, %4, %cst {dimension_numbers = #tpu.dot_dimension_numbers<[1], [0], [0], [1], [0, 0, 1, 1], [], []>} : vector<2x32xbf16>, vector<32x64xbf16>, vector<2x64xf32> -> vector<2x64xf32>
    %c0_4 = arith.constant 0 : index
    %c0_5 = arith.constant 0 : index
    %6 = vector.load %arg8[%c0_4, %c0_5] : memref<1x64xf32, #tpu.memory_space<vmem>>, vector<1x64xf32>
    %7 = vector.broadcast %6 : vector<1x64xf32> to vector<2x64xf32>
    %8 = arith.addf %5, %7 : vector<2x64xf32>
    %cst_6 = arith.constant 5.000000e-01 : f32
    %9 = vector.broadcast %cst_6 : f32 to vector<2x64xf32>
    %10 = arith.mulf %9, %8 : vector<2x64xf32>
    %cst_7 = arith.constant 4.471500e-02 : f32
    %11 = vector.broadcast %cst_7 : f32 to vector<2x64xf32>
    %12 = arith.mulf %11, %8 : vector<2x64xf32>
    %13 = arith.mulf %12, %8 : vector<2x64xf32>
    %14 = arith.mulf %13, %8 : vector<2x64xf32>
    %15 = arith.addf %8, %14 : vector<2x64xf32>
    %cst_8 = arith.constant 0.797884583 : f32
    %16 = vector.broadcast %cst_8 : f32 to vector<2x64xf32>
    %17 = arith.mulf %16, %15 : vector<2x64xf32>
    %18 = math.tanh %17 : vector<2x64xf32>
    %cst_9 = arith.constant 1.000000e+00 : f32
    %19 = vector.broadcast %cst_9 : f32 to vector<2x64xf32>
    %20 = arith.addf %19, %18 : vector<2x64xf32>
    %21 = arith.mulf %10, %20 : vector<2x64xf32>
    %c0_10 = arith.constant 0 : index
    %c0_11 = arith.constant 0 : index
    %22 = vector.load %arg14[%c0_10, %c0_11] : memref<2x32xf32, #tpu.memory_space<vmem>>, vector<2x32xf32>
    %23 = arith.truncf %21 : vector<2x64xf32> to vector<2x64xbf16>
    %c0_12 = arith.constant 0 : index
    %c0_13 = arith.constant 0 : index
    %24 = vector.load %arg9[%c0_12, %c0_13] : memref<64x32xbf16, #tpu.memory_space<vmem>>, vector<64x32xbf16>
    %cst_14 = arith.constant dense<0.000000e+00> : vector<2x32xf32>
    %25 = tpu.matmul %23, %24, %cst_14 {dimension_numbers = #tpu.dot_dimension_numbers<[1], [0], [0], [1], [0, 0, 1, 1], [], []>} : vector<2x64xbf16>, vector<64x32xbf16>, vector<2x32xf32> -> vector<2x32xf32>
    %26 = arith.addf %22, %25 : vector<2x32xf32>
    %c0_15 = arith.constant 0 : index
    %c0_16 = arith.constant 0 : index
    %27 = vector.load %arg14[%c0_15, %c0_16] : memref<2x32xf32, #tpu.memory_space<vmem>>, vector<2x32xf32>
    tpu.vector_store %arg14[%c0_15, %c0_16], %26 {strides = array<i32>} : memref<2x32xf32, #tpu.memory_space<vmem>>, vector<2x32xf32>,
    %c0_i32_17 = arith.constant 0 : i32
    %28 = arith.cmpi eq, %arg1, %c0_i32_17 : i32
    %29 = arith.extui %28 : i1 to i32
    %c0_i32_18 = arith.constant 0 : i32
    %30 = arith.cmpi ne, %29, %c0_i32_18 : i32
    scf.if %30 {
      %c0_19 = arith.constant 0 : index
      %c0_20 = arith.constant 0 : index
      %31 = vector.load %arg13[%c0_19, %c0_20] : memref<2x32xf32, #tpu.memory_space<vmem>>, vector<2x32xf32>
      %c0_21 = arith.constant 0 : index
      %c0_22 = arith.constant 0 : index
      %32 = vector.load %arg14[%c0_21, %c0_22] : memref<2x32xf32, #tpu.memory_space<vmem>>, vector<2x32xf32>
      %33 = arith.addf %31, %32 : vector<2x32xf32>
      %c0_23 = arith.constant 0 : index
      %c0_24 = arith.constant 0 : index
      %34 = vector.load %arg10[%c0_23, %c0_24] : memref<1x32xf32, #tpu.memory_space<vmem>>, vector<1x32xf32>
      %35 = vector.broadcast %34 : vector<1x32xf32> to vector<2x32xf32>
      %36 = arith.addf %33, %35 : vector<2x32xf32>
      %c0_25 = arith.constant 0 : index
      %c0_26 = arith.constant 0 : index
      %37 = vector.load %arg11[%c0_25, %c0_26] : memref<2x32xf32, #tpu.memory_space<vmem>>, vector<2x32xf32>
      tpu.vector_store %arg11[%c0_25, %c0_26], %36 {strides = array<i32>} : memref<2x32xf32, #tpu.memory_space<vmem>>, vector<2x32xf32>,
    } else {
    }
    return
  }
  func.func @transform_0(%arg0: i32, %arg1: i32) -> (i32, i32) {
    %c0_i32 = arith.constant 0 : i32
    %c0_i32_0 = arith.constant 0 : i32
    return %arg0, %c0_i32 : i32, i32
  }
  func.func @transform_1(%arg0: i32, %arg1: i32) -> (i32, i32) {
    %c0_i32 = arith.constant 0 : i32
    %c0_i32_0 = arith.constant 0 : i32
    %c0_i32_1 = arith.constant 0 : i32
    return %c0_i32, %c0_i32_0 : i32, i32
  }
  func.func @transform_2(%arg0: i32, %arg1: i32) -> (i32, i32) {
    %c0_i32 = arith.constant 0 : i32
    %c0_i32_0 = arith.constant 0 : i32
    %c0_i32_1 = arith.constant 0 : i32
    return %c0_i32, %c0_i32_0 : i32, i32
  }
  func.func @transform_3(%arg0: i32, %arg1: i32) -> (i32, i32) {
    %c0_i32 = arith.constant 0 : i32
    %c0_i32_0 = arith.constant 0 : i32
    %c0_i32_1 = arith.constant 0 : i32
    return %c0_i32, %c0_i32_0 : i32, i32
  }
  func.func @transform_4(%arg0: i32, %arg1: i32) -> (i32, i32) {
    %c0_i32 = arith.constant 0 : i32
    %c0_i32_0 = arith.constant 0 : i32
    %c0_i32_1 = arith.constant 0 : i32
    return %c0_i32, %c0_i32_0 : i32, i32
  }
  func.func @transform_5(%arg0: i32, %arg1: i32) -> (i32, i32) {
    %c0_i32 = arith.constant 0 : i32
    %c0_i32_0 = arith.constant 0 : i32
    return %c0_i32, %arg1 : i32, i32
  }
  func.func @transform_6(%arg0: i32, %arg1: i32) -> (i32, i32) {
    %c0_i32 = arith.constant 0 : i32
    %c0_i32_0 = arith.constant 0 : i32
    return %c0_i32, %arg1 : i32, i32
  }
  func.func @transform_7(%arg0: i32, %arg1: i32) -> (i32, i32) {
    %c0_i32 = arith.constant 0 : i32
    %c0_i32_0 = arith.constant 0 : i32
    return %arg1, %c0_i32 : i32, i32
  }
  func.func @transform_8(%arg0: i32, %arg1: i32) -> (i32, i32) {
    %c0_i32 = arith.constant 0 : i32
    %c0_i32_0 = arith.constant 0 : i32
    %c0_i32_1 = arith.constant 0 : i32
    return %c0_i32, %c0_i32_0 : i32, i32
  }
  func.func @transform_9(%arg0: i32, %arg1: i32) -> (i32, i32) {
    %c0_i32 = arith.constant 0 : i32
    %c0_i32_0 = arith.constant 0 : i32
    return %arg0, %c0_i32 : i32, i32
  }
}

</mosaic_0001>

<llo_original>
// kernel: siglip_mha_pooling_head.2
$region0: #{siglip_mha_pooling_head.2}
  #allocation0 [shape = 'u32[]', space=smem, size = 0x4, offset = 0x4, fixed_abs, tag = 'smem constant byte address 0x4 - core index']
  #allocation1 [shape = 'u32[72,128]{1,0:T(1,128)}', space=vmem, size = 0x9000, scoped, tag = 'internal scratch']
  #allocation2 [shape = 'f32[1,4]{1,0:T(1,128)}', space=vmem, size = 0x200, scoped, tag = 'scratch operand']
  #allocation3 [shape = 'f32[1,4]{1,0:T(1,128)}', space=vmem, size = 0x200, scoped, tag = 'scratch operand']
  #allocation4 [shape = 'f32[1,32]{1,0:T(1,128)}', space=vmem, size = 0x200, scoped, tag = 'scratch operand']
  %s0 = inlined_call_operand.vmem [shape: f32[1,32], index: 0, kind: input, shape index: {}]
  %s1 = inlined_call_operand.vmem [shape: f32[2,8,32], index: 1, kind: input, shape index: {}]
  %s2 = inlined_call_operand.vmem [shape: bf16[32,64], index: 2, kind: input, shape index: {}]
  %s3 = inlined_call_operand.vmem [shape: f32[1,64], index: 3, kind: input, shape index: {}]
  %s4 = inlined_call_operand.vmem [shape: f32[32,4], index: 4, kind: input, shape index: {}]
  %s5 = inlined_call_operand.vmem [shape: f32[2,1,32], index: 5, kind: output, shape index: {}]
  %s6 = sld [smem:[#allocation0]]
  $region61: #{siglip_mha_pooling_head.2} parent=0
    _
  %s8 = ssub.s32 1, %s6
  %s9 = scalar_select 0, %s8, %s6
  loop: start=0, step=1, limit=4
  $region2: #{siglip_mha_pooling_head.2} parent=0 // loop_pre_header
    _
  $region3: #{siglip_mha_pooling_head.2} parent=0 // loop_header
    %s11 = sphi 0, %s15
    %p12 = scmp.ge.s32.totalorder %s11, 4
    %s18 = sphi 0, %s30
    %s19 = sphi 0, %s26
    %s20 = sphi 0, %s18
    %s21 = sphi 0, %s19
    %s22 = sphi 0, %s20
    %s23 = sphi 0, %s21
    %s31 = sphi 0, %s31
    %s33 = sphi 0, %s31
    %s34 = sphi 0, %s33
    %s48 = sphi 0, %s34
    %s56 = sphi 0, %s58
    %s59 = sphi 0, %s56
    %s60 = sphi 0, %s59
    %s76 = sphi 0, %s60
    %s80 = sphi 0, %s80
    %s82 = sphi 0, %s80
    %s83 = sphi 0, %s82
    %s97 = sphi 0, %s83
    %s101 = sphi 0, %s101
    %s103 = sphi 0, %s101
    %s104 = sphi 0, %s103
    %s118 = sphi 0, %s104
    %s122 = sphi 0, %s122
    %s124 = sphi 0, %s122
    %s125 = sphi 0, %s124
    %s139 = sphi 0, %s125
    %s145 = sphi 0, %s147
    %s148 = sphi 0, %s145
    %s149 = sphi 0, %s148
    %s165 = sphi 0, %s149
  $region4: #{siglip_mha_pooling_head.2} parent=0 // loop_header_branch
    %14 = sbr.rel (%p12) target = $region8
  $region5: #{siglip_mha_pooling_head.2} parent=0 // loop_body
    %s16 = ssub.s32 %s11, 1
    %s17 = ssub.s32 %s11, 2
    %s24 = sadd.s32 1, %s19
    %p25 = scmp.ge.s32.totalorder %s24, 1
    %s26 = scalar_select %p25, 0, %s24
    %s27 = sadd.s32 1, %s18
    %s28 = scalar_select %p25, %s27, %s18
    %p29 = scmp.ge.s32.totalorder %s28, 2
    %s30 = scalar_select %p29, 0, %s28
    %s32 = sadd.s32 %s31, 1
    %p35 = scmp.eq.s32.totalorder %s11, 1
    %p36 = scmp.ne.s32.totalorder %s31, %s33
    %p37 = scmp.eq.s32.totalorder %s11, 0
    %p38 = por %p36, %p37
    %p39 = scmp.ne.s32.totalorder %s31, %s33
    %p40 = scmp.eq.s32.totalorder %s16, 1
    %p41 = por %p39, %p40
    %p42 = scmp.ne.s32.totalorder %s33, %s34
    %p43 = scmp.eq.s32.totalorder %s16, 0
    %p44 = por %p42, %p43
    %p45 = scmp.ne.s32.totalorder %s33, %s34
    %p46 = scmp.eq.s32.totalorder %s17, 1
    %p47 = por %p45, %p46
    %p49 = scmp.ne.s32.totalorder %s34, %s48
    %p50 = scmp.eq.s32.totalorder %s17, 0
    %p51 = por %p49, %p50
    %s52 = ssub.s32 %s18, %s30
    %s53 = ssub.s32 %s19, %s26
    %s54 = sor.u32 %s52, %s53
    %p55 = scmp.eq.s32.totalorder %s54, 0
    %s57 = sadd.s32 %s56, 1
    %s58 = scalar_select %p55, %s56, %s57
    %p61 = pneg %p55
    %p62 = scmp.eq.s32.totalorder %s11, 1
    %p63 = por %p61, %p62
    %p64 = scmp.ne.s32.totalorder %s56, %s59
    %p65 = scmp.eq.s32.totalorder %s11, 0
    %p66 = por %p64, %p65
    %p67 = scmp.ne.s32.totalorder %s56, %s59
    %p68 = scmp.eq.s32.totalorder %s16, 1
    %p69 = por %p67, %p68
    %p70 = scmp.ne.s32.totalorder %s59, %s60
    %p71 = scmp.eq.s32.totalorder %s16, 0
    %p72 = por %p70, %p71
    %p73 = scmp.ne.s32.totalorder %s59, %s60
    %p74 = scmp.eq.s32.totalorder %s17, 1
    %p75 = por %p73, %p74
    %p77 = scmp.ne.s32.totalorder %s60, %s76
    %p78 = scmp.eq.s32.totalorder %s17, 0
    %p79 = por %p77, %p78
    %s81 = sadd.s32 %s80, 1
    %p84 = scmp.eq.s32.totalorder %s11, 1
    %p85 = scmp.ne.s32.totalorder %s80, %s82
    %p86 = scmp.eq.s32.totalorder %s11, 0
    %p87 = por %p85, %p86
    %p88 = scmp.ne.s32.totalorder %s80, %s82
    %p89 = scmp.eq.s32.totalorder %s16, 1
    %p90 = por %p88, %p89
    %p91 = scmp.ne.s32.totalorder %s82, %s83
    %p92 = scmp.eq.s32.totalorder %s16, 0
    %p93 = por %p91, %p92
    %p94 = scmp.ne.s32.totalorder %s82, %s83
    %p95 = scmp.eq.s32.totalorder %s17, 1
    %p96 = por %p94, %p95
    %p98 = scmp.ne.s32.totalorder %s83, %s97
    %p99 = scmp.eq.s32.totalorder %s17, 0
    %p100 = por %p98, %p99
    %s102 = sadd.s32 %s101, 1
    %p105 = scmp.eq.s32.totalorder %s11, 1
    %p106 = scmp.ne.s32.totalorder %s101, %s103
    %p107 = scmp.eq.s32.totalorder %s11, 0
    %p108 = por %p106, %p107
    %p109 = scmp.ne.s32.totalorder %s101, %s103
    %p110 = scmp.eq.s32.totalorder %s16, 1
    %p111 = por %p109, %p110
    %p112 = scmp.ne.s32.totalorder %s103, %s104
    %p113 = scmp.eq.s32.totalorder %s16, 0
    %p114 = por %p112, %p113
    %p115 = scmp.ne.s32.totalorder %s103, %s104
    %p116 = scmp.eq.s32.totalorder %s17, 1
    %p117 = por %p115, %p116
    %p119 = scmp.ne.s32.totalorder %s104, %s118
    %p120 = scmp.eq.s32.totalorder %s17, 0
    %p121 = por %p119, %p120
    %s123 = sadd.s32 %s122, 1
    %p126 = scmp.eq.s32.totalorder %s11, 1
    %p127 = scmp.ne.s32.totalorder %s122, %s124
    %p128 = scmp.eq.s32.totalorder %s11, 0
    %p129 = por %p127, %p128
    %p130 = scmp.ne.s32.totalorder %s122, %s124
    %p131 = scmp.eq.s32.totalorder %s16, 1
    %p132 = por %p130, %p131
    %p133 = scmp.ne.s32.totalorder %s124, %s125
    %p134 = scmp.eq.s32.totalorder %s16, 0
    %p135 = por %p133, %p134
    %p136 = scmp.ne.s32.totalorder %s124, %s125
    %p137 = scmp.eq.s32.totalorder %s17, 1
    %p138 = por %p136, %p137
    %p140 = scmp.ne.s32.totalorder %s125, %s139
    %p141 = scmp.eq.s32.totalorder %s17, 0
    %p142 = por %p140, %p141
    %s143 = ssub.s32 %s18, %s30
    %p144 = scmp.eq.s32.totalorder %s143, 0
    %s146 = sadd.s32 %s145, 1
    %s147 = scalar_select %p144, %s145, %s146
    %p150 = pneg %p144
    %p151 = scmp.eq.s32.totalorder %s11, 1
    %p152 = por %p150, %p151
    %p153 = scmp.ne.s32.totalorder %s145, %s148
    %p154 = scmp.eq.s32.totalorder %s11, 0
    %p155 = por %p153, %p154
    %p156 = scmp.ne.s32.totalorder %s145, %s148
    %p157 = scmp.eq.s32.totalorder %s16, 1
    %p158 = por %p156, %p157
    %p159 = scmp.ne.s32.totalorder %s148, %s149
    %p160 = scmp.eq.s32.totalorder %s16, 0
    %p161 = por %p159, %p160
    %p162 = scmp.ne.s32.totalorder %s148, %s149
    %p163 = scmp.eq.s32.totalorder %s17, 1
    %p164 = por %p162, %p163
    %p166 = scmp.ne.s32.totalorder %s149, %s165
    %p167 = scmp.eq.s32.totalorder %s17, 0
    %p168 = por %p166, %p167
    %p169 = scmp.le.s32.totalorder 1, %s11
    %p170 = scmp.lt.s32.totalorder %s11, 3
    %p171 = pnand %p169, %p170
    %p172 = pneg %p171
    // Predicated region
    $region9: #{siglip_mha_pooling_head.2} parent=5 // pred_check
      _
    $region10: #{siglip_mha_pooling_head.2} parent=5 // pred_check_branch
      %174 = sbr.rel (%p171) target = $region12
    $region11: #{siglip_mha_pooling_head.2} parent=5 // pred_region
      %s175 = ssub.s32 %s11, 1
      // Predicated region
      $region13: #{siglip_mha_pooling_head.2} parent=11 // pred_check
        %p176 = pneg %p44
      $region14: #{siglip_mha_pooling_head.2} parent=11 // pred_check_branch
        %178 = sbr.rel (%p176) target = $region16
      $region15: #{siglip_mha_pooling_head.2} parent=11 // pred_region
        _
      $region16: #{siglip_mha_pooling_head.2} parent=11 // pred_fallthru
        _
      // Predicated region
      $region17: #{siglip_mha_pooling_head.2} parent=11 // pred_check
        %p179 = pneg %p93
      $region18: #{siglip_mha_pooling_head.2} parent=11 // pred_check_branch
        %181 = sbr.rel (%p179) target = $region20
      $region19: #{siglip_mha_pooling_head.2} parent=11 // pred_region
        _
      $region20: #{siglip_mha_pooling_head.2} parent=11 // pred_fallthru
        _
      // Predicated region
      $region21: #{siglip_mha_pooling_head.2} parent=11 // pred_check
        %p182 = pneg %p114
      $region22: #{siglip_mha_pooling_head.2} parent=11 // pred_check_branch
        %184 = sbr.rel (%p182) target = $region24
      $region23: #{siglip_mha_pooling_head.2} parent=11 // pred_region
        _
      $region24: #{siglip_mha_pooling_head.2} parent=11 // pred_fallthru
        _
      // Predicated region
      $region25: #{siglip_mha_pooling_head.2} parent=11 // pred_check
        %p185 = pneg %p135
      $region26: #{siglip_mha_pooling_head.2} parent=11 // pred_check_branch
        %187 = sbr.rel (%p185) target = $region28
      $region27: #{siglip_mha_pooling_head.2} parent=11 // pred_region
        _
      $region28: #{siglip_mha_pooling_head.2} parent=11 // pred_fallthru
        _
    $region12: #{siglip_mha_pooling_head.2} parent=5 // pred_fallthru
      _
    %p188 = scmp.lt.s32.totalorder %s11, 2
    // Predicated region
    $region29: #{siglip_mha_pooling_head.2} parent=5 // pred_check
      %p189 = pneg %p188
    $region30: #{siglip_mha_pooling_head.2} parent=5 // pred_check_branch
      %191 = sbr.rel (%p189) target = $region32
    $region31: #{siglip_mha_pooling_head.2} parent=5 // pred_region
      // Predicated region
      $region33: #{siglip_mha_pooling_head.2} parent=31 // pred_check
        %p192 = pneg %p66
      $region34: #{siglip_mha_pooling_head.2} parent=31 // pred_check_branch
        %194 = sbr.rel (%p192) target = $region36
      $region35: #{siglip_mha_pooling_head.2} parent=31 // pred_region
        %p195 = scmp.lt.s32.totalorder %s18, 1
        %s196 = scalar_select %p195, %s18, 1
        %p197 = scmp.lt.s32.totalorder %s19, 0
        %s198 = scalar_select %p197, %s19, 0
        %s199 = sadd.s32 %s198, %s196
        %s200 = smul.addr %s199, 8
        %s201 = scalar_lea.vmem %s1, %s200
      $region36: #{siglip_mha_pooling_head.2} parent=31 // pred_fallthru
        _
    $region32: #{siglip_mha_pooling_head.2} parent=5 // pred_fallthru
      _
    %p202 = scmp.le.s32.totalorder 1, %s11
    %p203 = scmp.lt.s32.totalorder %s11, 3
    %p204 = pnand %p202, %p203
    %p205 = pneg %p204
    // Predicated region
    $region37: #{siglip_mha_pooling_head.2} parent=5 // pred_check
      _
    $region38: #{siglip_mha_pooling_head.2} parent=5 // pred_check_branch
      %207 = sbr.rel (%p204) target = $region40
    $region39: #{siglip_mha_pooling_head.2} parent=5 // pred_region
      %s208 = ssub.s32 %s11, 1
      %p209 = pneg %p44
      %p210 = pneg %p41
      %p211 = scmp.lt.s32.totalorder %s20, 1
      %s212 = scalar_select %p211, %s20, 1
      %p213 = scmp.lt.s32.totalorder %s21, 0
      %s214 = scalar_select %p213, %s21, 0
      %s215 = sadd.s32 %s214, %s212
      %s216 = smul.addr %s215, 8
      %s217 = scalar_lea.vmem %s1, %s216
      %p218 = pneg %p72
      %p219 = pneg %p69
      %p220 = pneg %p93
      %p221 = pneg %p90
      %p222 = pneg %p114
      %p223 = pneg %p111
      %p224 = pneg %p135
      %p225 = pneg %p132
      %p226 = pneg %p161
      %p227 = pneg %p158
      %p228 = scmp.lt.s32.totalorder %s20, 1
      %s229 = scalar_select %p228, %s20, 1
      %s230 = scalar_lea.vmem %s5, %s229
      %p231 = scmp.lt.s32.totalorder %s20, 1
      %s232 = scalar_select %p231, %s20, 1
      %p233 = scmp.lt.s32.totalorder %s21, 0
      %s234 = scalar_select %p233, %s21, 0
      %s235 = sadd.s32 %s234, %s232
      %s236 = smul.addr %s235, 8
      %s237 = scalar_lea.vmem %s1, %s236
      %p238 = scmp.lt.s32.totalorder %s20, 1
      %s239 = scalar_select %p238, %s20, 1
      %s240 = scalar_lea.vmem %s5, %s239
      %p242 = scmp.eq.s32.totalorder %s21, 0
      // Predicated region
      $region41: #{siglip_mha_pooling_head.2} parent=39 // pred_check
        %p243 = pneg %p242
      $region42: #{siglip_mha_pooling_head.2} parent=39 // pred_check_branch
        %245 = sbr.rel (%p243) target = $region44
      $region43: #{siglip_mha_pooling_head.2} parent=39 // pred_region
        %vm246 = vcmask 24576
        %247 = vst.msk [vmem:[#allocation2] sm:$0x1] %vm246, -inf
        %248 = vst.msk [vmem:[#allocation3] sm:$0x1] %vm246, 0.0
        %vm249 = vcmask 253952
        %250 = vst.msk [vmem:[#allocation4] sm:$0x1] %vm249, 0.0
      $region44: #{siglip_mha_pooling_head.2} parent=39 // pred_fallthru
        _
      %v251 = vld [vmem:[%s237] sm:$0xff]
      %v252 = vpack.c.bf16 %v251, %v251
      %v253 = vld [vmem:[%s2] sm:$0xf]
      %v254 = vld [vmem:[%s2 + $0x4] sm:$0xf]
      %v255 = vld [vmem:[%s2 + $0x8] sm:$0xf]
      %v256 = vld [vmem:[%s2 + $0xc] sm:$0xf]
      %v257 = vld [vmem:[%s3] sm:$0x1]
      %v259 = vperm.slane %v257, 0
      %v265 = vunpack.c.l.b16 %v253
      %v266 = vunpack.c.l.b16 %v254
      %v267 = vunpack.c.l.b16 %v255
      %v268 = vunpack.c.l.b16 %v256
      %v269 = vpack.c.b16 %v266, %v265
      %v270 = vpack.c.b16 %v268, %v267
      %vm273 = vcmask 261120
      %v275 = vsel %vm273, %v252, 0
      %277 = vmatpush.bf16.msra.mxu0 0
      %278 = vmatpush.bf16.msra.mxu0 0
      %279 = vmatpush.bf16.msra.mxu0 0
      %280 = vmatpush.bf16.msra.mxu0 0
      %281 = vmatpush.bf16.msra.mxu0 0
      %282 = vmatpush.bf16.msra.mxu0 0
      %283 = vmatpush.bf16.msra.mxu0 %v270
      %284 = vmatpush.bf16.msra.mxu0 %v269
      %285 = vmatmul.bf16.gmra.mxu0 %v275
      %v286 = vpop.f32.mrf.mxu0
      %v287 = vadd.f32 %v259, %v286
      %v288 = vpop.f32.mrf.mxu0
      %289 = vdwg.mxu0
      %v290 = vld [vmem:[%s0] sm:$0x1]
      %v291 = vld [vmem:[%s4] sm:$0xff]
      %v292 = vld [vmem:[%s4 + $0x8] sm:$0xff]
      %v293 = vld [vmem:[%s4 + $0x10] sm:$0xff]
      %v294 = vld [vmem:[%s4 + $0x18] sm:$0xff]
      %v296 = vperm.slane %v290, 0
      %v298 = vmul.f32 %v287, %v296
      %v300 = vsel %vm273, %v298, 0
      %302 = vmatpush.msra.mxu0 0.0
      %303 = vmatpush.msra.mxu0 0.0
      %304 = vmatpush.msra.mxu0 0.0
      %305 = vmatpush.msra.mxu0 0.0
      %306 = vmatpush.msra.mxu0 0.0
      %307 = vmatpush.msra.mxu0 0.0
      %308 = vmatpush.msra.mxu0 0.0
      %309 = vmatpush.msra.mxu0 0.0
      %310 = vmatpush.msra.mxu0 0.0
      %311 = vmatpush.msra.mxu0 0.0
      %312 = vmatpush.msra.mxu0 0.0
      %313 = vmatpush.msra.mxu0 0.0
      %314 = vmatpush.msra.mxu0 %v294
      %315 = vmatpush.msra.mxu0 %v293
      %316 = vmatpush.msra.mxu0 %v292
      %317 = vmatpush.msra.mxu0 %v291
      %318 = vmatmul.f32.gmra.mxu0 %v300
      %v319 = vpop.f32.mrf.mxu0
      %v320 = vadd.f32 0.0, %v319
      %321 = vdwg.mxu0
      %v322 = vld [vmem:[#allocation2] sm:$0x1]
      %vm323 = vcmask 31744
      %v324 = vsel %vm323, %v320, -inf
      %v325 = vrot.slane %v324, 4
      %v326 = vmax.f32 %v324, %v325
      %v327 = vrot.slane %v326, 2
      %v328 = vmax.f32 %v326, %v327
      %v329 = vrot.slane %v328, 1
      %v330 = vmax.f32 %v328, %v329
      %v331 = vmax.f32 %v322, %v330
      %v332 = vsub.f32 %v322, %v331
      %v333 = vmul.f32 %v332, 1.442695
      %v334 = vpow.pop %v333
      %v336 = vperm.slane %v331, 0
      %v338 = vsub.f32 %v320, %v336
      %v339 = vmul.f32 %v338, 1.442695
      %v340 = vpow.pop %v339
      %v341 = vld [vmem:[#allocation3] sm:$0x1]
      %v342 = vmul.f32 %v334, %v341
      %v343 = vsel %vm323, %v340, 0.0
      %v344 = vrot.slane %v343, 4
      %v345 = vadd.f32 %v343, %v344
      %v346 = vrot.slane %v345, 2
      %v347 = vadd.f32 %v345, %v346
      %v348 = vrot.slane %v347, 1
      %v349 = vadd.f32 %v347, %v348
      %v350 = vadd.f32 %v342, %v349
      %vm351 = vcmask 24576
      %352 = vst.msk [vmem:[#allocation3] sm:$0x1] %vm351, %v350
      %v354 = vsel %vm323, %v340, 0
      %v357 = vsel %vm323, %v291, 0
      %v360 = vsel %vm323, %v292, 0
      %v363 = vsel %vm323, %v293, 0
      %v366 = vsel %vm323, %v294, 0
      %368 = vmatpush.xpose.msra.mxu0 0.0
      %369 = vmatpush.xpose.msra.mxu0 0.0
      %370 = vmatpush.xpose.msra.mxu0 0.0
      %371 = vmatpush.xpose.msra.mxu0 0.0
      %372 = vmatpush.xpose.msra.mxu0 0.0
      %373 = vmatpush.xpose.msra.mxu0 0.0
      %374 = vmatpush.xpose.msra.mxu0 0.0
      %375 = vmatpush.xpose.msra.mxu0 0.0
      %376 = vmatpush.xpose.msra.mxu0 0.0
      %377 = vmatpush.xpose.msra.mxu0 0.0
      %378 = vmatpush.xpose.msra.mxu0 0.0
      %379 = vmatpush.xpose.msra.mxu0 0.0
      %380 = vmatpush.xpose.msra.mxu0 %v366
      %381 = vmatpush.xpose.msra.mxu0 %v363
      %382 = vmatpush.xpose.msra.mxu0 %v360
      %383 = vmatpush.xpose.msra.mxu0 %v357
      %384 = vmatmul.f32.gmra.mxu0 %v354
      %v385 = vpop.f32.mrf.mxu0
      %v386 = vadd.f32 0.0, %v385
      %387 = vdwg.mxu0
      %v389 = vsel %vm323, %v334, 0
      %391 = vmatpush.xpose.msra.mxu0 0.0
      %392 = vmatpush.xpose.msra.mxu0 0.0
      %393 = vmatpush.xpose.msra.mxu0 0.0
      %394 = vmatpush.xpose.msra.mxu0 0.0
      %395 = vmatpush.xpose.msra.mxu0 0.0
      %396 = vmatpush.xpose.msra.mxu0 0.0
      %397 = vmatpush.xpose.msra.mxu0 0.0
      %398 = vmatpush.xpose.msra.mxu0 0.0
      %399 = vmatpush.xpose.msra.mxu0 0.0
      %400 = vmatpush.xpose.msra.mxu0 0.0
      %401 = vmatpush.xpose.msra.mxu0 0.0
      %402 = vmatpush.xpose.msra.mxu0 0.0
      %403 = vmatpush.xpose.msra.mxu0 %v366
      %404 = vmatpush.xpose.msra.mxu0 %v363
      %405 = vmatpush.xpose.msra.mxu0 %v360
      %406 = vmatpush.xpose.msra.mxu0 %v357
      %407 = vmatmul.f32.gmra.mxu0 %v389
      %v408 = vpop.f32.mrf.mxu0
      %v409 = vadd.f32 0.0, %v408
      %410 = vdwg.mxu0
      %v411 = vld [vmem:[#allocation4] sm:$0x1]
      %v412 = vmul.f32 %v409, %v411
      %414 = vrot.lane.b32.xlu0 %v287, 96
      %v415 = vpop.permute.xlu0 %414
      %v417 = vmul.f32 %v386, %v415
      %v418 = vsel %vm273, %v417, 0.0
      %v419 = vrot.slane %v418, 4
      %v420 = vadd.f32 %v418, %v419
      %v421 = vrot.slane %v420, 2
      %v422 = vadd.f32 %v420, %v421
      %v423 = vrot.slane %v422, 1
      %v424 = vadd.f32 %v422, %v423
      %v425 = vadd.f32 %v412, %v424
      %vm426 = vcmask 253952
      %427 = vst.msk [vmem:[#allocation4] sm:$0x1] %vm426, %v425
      %428 = vst.msk [vmem:[#allocation2] sm:$0x1] %vm351, %v331
      // Predicated region
      $region45: #{siglip_mha_pooling_head.2} parent=39 // pred_check
        %p429 = pneg %p242
      $region46: #{siglip_mha_pooling_head.2} parent=39 // pred_check_branch
        %431 = sbr.rel (%p429) target = $region48
      $region47: #{siglip_mha_pooling_head.2} parent=39 // pred_region
        %v432 = vld [vmem:[#allocation3] sm:$0x1]
        %v434 = vsel %vm323, %v432, 0
        %436 = vmatpush.xpose.msra.mxu0 0.0
        %437 = vmatpush.xpose.msra.mxu0 0.0
        %438 = vmatpush.xpose.msra.mxu0 0.0
        %439 = vmatpush.xpose.msra.mxu0 0.0
        %440 = vmatpush.xpose.msra.mxu0 0.0
        %441 = vmatpush.xpose.msra.mxu0 0.0
        %442 = vmatpush.xpose.msra.mxu0 0.0
        %443 = vmatpush.xpose.msra.mxu0 0.0
        %444 = vmatpush.xpose.msra.mxu0 0.0
        %445 = vmatpush.xpose.msra.mxu0 0.0
        %446 = vmatpush.xpose.msra.mxu0 0.0
        %447 = vmatpush.xpose.msra.mxu0 0.0
        %448 = vmatpush.xpose.msra.mxu0 %v366
        %449 = vmatpush.xpose.msra.mxu0 %v363
        %450 = vmatpush.xpose.msra.mxu0 %v360
        %451 = vmatpush.xpose.msra.mxu0 %v357
        %452 = vmatmul.f32.gmra.mxu0 %v434
        %v453 = vpop.f32.mrf.mxu0
        %v454 = vadd.f32 0.0, %v453
        %455 = vdwg.mxu0
        %v456 = vld [vmem:[#allocation4] sm:$0x1]
        %v457 = vrcp.pop %v454
        %v458 = vmul.f32 %v454, %v457
        %v459 = vsub.f32 1.0, %v458
        %v460 = vmul.f32 %v457, %v459
        %v461 = vadd.f32 %v457, %v460
        %vm462 = vweird.f32 %v454
        %vm463 = vweird.f32 %v457
        %vm464 = vmor %vm462, %vm463
        %v465 = vsel %vm464, %v457, %v461
        %v466 = vand.u32 2147483647, %v454
        %vm467 = vcmp.eq.f32.partialorder %v466, 8.507059e+37
        %v468 = vand.u32 %v454, 2147483648
        %v469 = vor.u32 1.1754944e-38, %v468
        %v470 = vsel %vm467, %v469, %v465
        %v471 = vmul.f32 %v456, %v470
        %472 = vst.msk [vmem:[%s240] sm:$0x1] %vm426, %v471
      $region48: #{siglip_mha_pooling_head.2} parent=39 // pred_fallthru
        _
      %p473 = scmp.lt.s32.totalorder %s20, 1
      %s474 = scalar_select %p473, %s20, 1
      %s475 = scalar_lea.vmem %s5, %s474
      // Predicated region
      $region49: #{siglip_mha_pooling_head.2} parent=39 // pred_check
        %p476 = pneg %p158
      $region50: #{siglip_mha_pooling_head.2} parent=39 // pred_check_branch
        %478 = sbr.rel (%p476) target = $region52
      $region51: #{siglip_mha_pooling_head.2} parent=39 // pred_region
        _
      $region52: #{siglip_mha_pooling_head.2} parent=39 // pred_fallthru
        _
    $region40: #{siglip_mha_pooling_head.2} parent=5 // pred_fallthru
      _
    %p479 = scmp.le.s32.totalorder 2, %s11
    // Predicated region
    $region53: #{siglip_mha_pooling_head.2} parent=5 // pred_check
      %p480 = pneg %p479
    $region54: #{siglip_mha_pooling_head.2} parent=5 // pred_check_branch
      %482 = sbr.rel (%p480) target = $region56
    $region55: #{siglip_mha_pooling_head.2} parent=5 // pred_region
      %s483 = ssub.s32 %s11, 2
      // Predicated region
      $region57: #{siglip_mha_pooling_head.2} parent=55 // pred_check
        %p484 = pneg %p164
      $region58: #{siglip_mha_pooling_head.2} parent=55 // pred_check_branch
        %486 = sbr.rel (%p484) target = $region60
      $region59: #{siglip_mha_pooling_head.2} parent=55 // pred_region
        %p487 = scmp.lt.s32.totalorder %s22, 1
        %s488 = scalar_select %p487, %s22, 1
        %s489 = scalar_lea.vmem %s5, %s488
      $region60: #{siglip_mha_pooling_head.2} parent=55 // pred_fallthru
        _
    $region56: #{siglip_mha_pooling_head.2} parent=5 // pred_fallthru
      _
  $region6: #{siglip_mha_pooling_head.2} parent=0 // loop_footer
    %s15 = sadd.s32 1, %s11
  $region7: #{siglip_mha_pooling_head.2} parent=0 // loop_footer_branch
    %10 = sbr.rel target = $region3
  $region8: #{siglip_mha_pooling_head.2} parent=0 // loop_exit
    _

// kernel: siglip_mha_pooling_head.3
$region0: #{siglip_mha_pooling_head.3}
  #allocation0 [shape = 'u32[]', space=smem, size = 0x4, offset = 0x4, fixed_abs, tag = 'smem constant byte address 0x4 - core index']
  #allocation1 [shape = 'u32[72,128]{1,0:T(1,128)}', space=vmem, size = 0x9000, scoped, tag = 'internal scratch']
  #allocation2 [shape = 'bf16[2,32]{1,0:T(2,128)(2,1)}', space=vmem, size = 0x200, scoped, tag = 'scratch operand']
  #allocation3 [shape = 'f32[2,32]{1,0:T(2,128)}', space=vmem, size = 0x400, scoped, tag = 'scratch operand']
  #allocation4 [shape = 'f32[2,32]{1,0:T(2,128)}', space=vmem, size = 0x400, scoped, tag = 'scratch operand']
  %s0 = inlined_call_operand.vmem [shape: f32[2,32], index: 0, kind: input, shape index: {}]
  %s1 = inlined_call_operand.vmem [shape: bf16[32,32], index: 1, kind: input, shape index: {}]
  %s2 = inlined_call_operand.vmem [shape: f32[1,32], index: 2, kind: input, shape index: {}]
  %s3 = inlined_call_operand.vmem [shape: f32[1,32], index: 3, kind: input, shape index: {}]
  %s4 = inlined_call_operand.vmem [shape: f32[1,32], index: 4, kind: input, shape index: {}]
  %s5 = inlined_call_operand.vmem [shape: bf16[32,64], index: 5, kind: input, shape index: {}]
  %s6 = inlined_call_operand.vmem [shape: f32[1,64], index: 6, kind: input, shape index: {}]
  %s7 = inlined_call_operand.vmem [shape: bf16[64,32], index: 7, kind: input, shape index: {}]
  %s8 = inlined_call_operand.vmem [shape: f32[1,32], index: 8, kind: input, shape index: {}]
  %s9 = inlined_call_operand.hbm [shape: f32[2,32], index: 9, kind: output, shape index: {}]
  %s10 = sld [smem:[#allocation0]]
  $region54: #{siglip_mha_pooling_head.3} parent=0
    _
  %s12 = ssub.s32 1, %s10
  %s13 = scalar_select 0, %s12, %s10
  $region1: #{siglip_mha_pooling_head.3} parent=0
    #allocation5 [shape = 'u8[1024]{0}', space=vmem, size = 0x400, scoped, tag = 'output window, operand 0, single buffered']
    #allocation6 [shape = 's32[1]{0}', space=sflag, size = 0x4, scoped, tag = 'scoped memory for siglip_mha_pooling_head.3']
    %14 = vsyncpa [#allocation6], 0
    // Predicated region
    $region2: #{siglip_mha_pooling_head.3} parent=1 // pred_check
      _
    $region3: #{siglip_mha_pooling_head.3} parent=1 // pred_check_branch
      %16 = sbr.rel (0) target = $region5
    $region4: #{siglip_mha_pooling_head.3} parent=1 // pred_region
      _
    $region5: #{siglip_mha_pooling_head.3} parent=1 // pred_fallthru
      _
    // Predicated region
    $region6: #{siglip_mha_pooling_head.3} parent=1 // pred_check
      _
    $region7: #{siglip_mha_pooling_head.3} parent=1 // pred_check_branch
      %18 = sbr.rel (0) target = $region9
    $region8: #{siglip_mha_pooling_head.3} parent=1 // pred_region
      _
    $region9: #{siglip_mha_pooling_head.3} parent=1 // pred_fallthru
      _
    // Predicated region
    $region10: #{siglip_mha_pooling_head.3} parent=1 // pred_check
      _
    $region11: #{siglip_mha_pooling_head.3} parent=1 // pred_check_branch
      %20 = sbr.rel (0) target = $region13
    $region12: #{siglip_mha_pooling_head.3} parent=1 // pred_region
      _
    $region13: #{siglip_mha_pooling_head.3} parent=1 // pred_fallthru
      _
    // Predicated region
    $region14: #{siglip_mha_pooling_head.3} parent=1 // pred_check
      _
    $region15: #{siglip_mha_pooling_head.3} parent=1 // pred_check_branch
      %22 = sbr.rel (0) target = $region17
    $region16: #{siglip_mha_pooling_head.3} parent=1 // pred_region
      _
    $region17: #{siglip_mha_pooling_head.3} parent=1 // pred_fallthru
      _
    // Predicated region
    $region18: #{siglip_mha_pooling_head.3} parent=1 // pred_check
      _
    $region19: #{siglip_mha_pooling_head.3} parent=1 // pred_check_branch
      %24 = sbr.rel (0) target = $region21
    $region20: #{siglip_mha_pooling_head.3} parent=1 // pred_region
      _
    $region21: #{siglip_mha_pooling_head.3} parent=1 // pred_fallthru
      _
    // Predicated region
    $region22: #{siglip_mha_pooling_head.3} parent=1 // pred_check
      _
    $region23: #{siglip_mha_pooling_head.3} parent=1 // pred_check_branch
      %26 = sbr.rel (0) target = $region25
    $region24: #{siglip_mha_pooling_head.3} parent=1 // pred_region
      _
    $region25: #{siglip_mha_pooling_head.3} parent=1 // pred_fallthru
      _
    // Predicated region
    $region26: #{siglip_mha_pooling_head.3} parent=1 // pred_check
      _
    $region27: #{siglip_mha_pooling_head.3} parent=1 // pred_check_branch
      %28 = sbr.rel (0) target = $region29
    $region28: #{siglip_mha_pooling_head.3} parent=1 // pred_region
      _
    $region29: #{siglip_mha_pooling_head.3} parent=1 // pred_fallthru
      _
    // Predicated region
    $region30: #{siglip_mha_pooling_head.3} parent=1 // pred_check
      _
    $region31: #{siglip_mha_pooling_head.3} parent=1 // pred_check_branch
      %30 = sbr.rel (0) target = $region33
    $region32: #{siglip_mha_pooling_head.3} parent=1 // pred_region
      _
    $region33: #{siglip_mha_pooling_head.3} parent=1 // pred_fallthru
      _
    // Predicated region
    $region34: #{siglip_mha_pooling_head.3} parent=1 // pred_check
      _
    $region35: #{siglip_mha_pooling_head.3} parent=1 // pred_check_branch
      %32 = sbr.rel (0) target = $region37
    $region36: #{siglip_mha_pooling_head.3} parent=1 // pred_region
      _
    $region37: #{siglip_mha_pooling_head.3} parent=1 // pred_fallthru
      _
    %p34 = scmp.eq.s32.totalorder 0, 0
    // Predicated region
    $region38: #{siglip_mha_pooling_head.3} parent=1 // pred_check
      %p35 = pneg %p34
    $region39: #{siglip_mha_pooling_head.3} parent=1 // pred_check_branch
      %37 = sbr.rel (%p35) target = $region41
    $region40: #{siglip_mha_pooling_head.3} parent=1 // pred_region
      %v38 = vld [vmem:[%s0] sm:$0x3]
      %v39 = vpack.c.bf16 %v38, %v38
      %v40 = vld [vmem:[%s1] sm:$0xf]
      %v41 = vld [vmem:[%s1 + $0x4] sm:$0xf]
      %v42 = vld [vmem:[%s1 + $0x8] sm:$0xf]
      %v43 = vld [vmem:[%s1 + $0xc] sm:$0xf]
      %v44 = vld [vmem:[%s2] sm:$0x1]
      %v46 = vperm.slane %v44, 0
      %v52 = vunpack.c.l.b16 %v40
      %v53 = vunpack.c.l.b16 %v41
      %v54 = vunpack.c.l.b16 %v42
      %v55 = vunpack.c.l.b16 %v43
      %v56 = vpack.c.b16 %v53, %v52
      %v57 = vpack.c.b16 %v55, %v54
      %vm60 = vcmask 261120
      %v62 = vsel %vm60, %v39, 0
      %64 = vmatpush.bf16.msra.mxu0 0
      %65 = vmatpush.bf16.msra.mxu0 0
      %66 = vmatpush.bf16.msra.mxu0 0
      %67 = vmatpush.bf16.msra.mxu0 0
      %68 = vmatpush.bf16.msra.mxu0 0
      %69 = vmatpush.bf16.msra.mxu0 0
      %70 = vmatpush.bf16.msra.mxu0 %v57
      %71 = vmatpush.bf16.msra.mxu0 %v56
      %72 = vmatmul.bf16.gmra.mxu0 %v62
      %v73 = vpop.f32.mrf.mxu0
      %v74 = vadd.f32 %v46, %v73
      %v75 = vpop.f32.mrf.mxu0
      %76 = vdwg.mxu0
      %vm77 = vcmask 254976
      %78 = vst.msk [vmem:[#allocation3] sm:$0x3] %vm77, %v74
      %v79 = vsel %vm77, %v74, 0.0
      %80 = vadd.xlane.f32.xlu0 %v79
      %v81 = vpop.xlane.xlu0 %80
      %v82 = vrcp.pop 32.0
      %v83 = vmul.f32 32.0, %v82
      %v84 = vsub.f32 1.0, %v83
      %v85 = vmul.f32 %v82, %v84
      %v86 = vadd.f32 %v82, %v85
      %vm87 = vweird.f32 %v82
      %v88 = vsel %vm87, %v82, %v86
      %v89 = vmul.f32 %v81, %v88
      %v90 = vsub.f32 %v74, %v89
      %v91 = vmul.f32 %v90, %v90
      %v92 = vsel %vm77, %v91, 0.0
      %93 = vadd.xlane.f32.xlu0 %v92
      %v94 = vpop.xlane.xlu0 %93
      %v95 = vmul.f32 %v94, %v88
      %v96 = vadd.f32 %v95, 1e-06
      %v97 = vrsqrt.pop %v96
      %v98 = vmul.f32 %v97, %v96
      %v99 = vmul.f32 %v98, %v97
      %v100 = vmul.f32 0.5, %v99
      %v101 = vsub.f32 1.5, %v100
      %v102 = vmul.f32 %v97, %v101
      %vm103 = vweird.f32 %v96
      %vm104 = vweird.f32 %v97
      %vm105 = vmor %vm103, %vm104
      %v106 = vsel %vm105, %v97, %v102
      %v107 = vmul.f32 %v90, %v106
      %v108 = vld [vmem:[%s3] sm:$0x1]
      %v110 = vperm.slane %v108, 0
      %v112 = vmul.f32 %v107, %v110
      %v113 = vld [vmem:[%s4] sm:$0x1]
      %v115 = vperm.slane %v113, 0
      %v117 = vadd.f32 %v112, %v115
      %v118 = vpack.c.bf16 %v117, %v117
      %vm119 = vcmask 253952
      %120 = vst.msk [vmem:[#allocation2] sm:$0x1] %vm119, %v118
      %121 = vst.msk [vmem:[#allocation4] sm:$0x3] %vm77, 0.0
    $region41: #{siglip_mha_pooling_head.3} parent=1 // pred_fallthru
      _
    %v122 = vld [vmem:[#allocation2] sm:$0x1]
    %v123 = vld [vmem:[%s5] sm:$0xf]
    %v124 = vld [vmem:[%s5 + $0x4] sm:$0xf]
    %v125 = vld [vmem:[%s5 + $0x8] sm:$0xf]
    %v126 = vld [vmem:[%s5 + $0xc] sm:$0xf]
    %v127 = vld [vmem:[%s6] sm:$0x1]
    %v129 = vperm.slane %v127, 0
    %v135 = vunpack.c.l.b16 %v123
    %v136 = vunpack.c.l.b16 %v124
    %v137 = vunpack.c.l.b16 %v125
    %v138 = vunpack.c.l.b16 %v126
    %v139 = vpack.c.b16 %v136, %v135
    %v140 = vpack.c.b16 %v138, %v137
    %vm143 = vcmask 261120
    %v145 = vsel %vm143, %v122, 0
    %147 = vmatpush.bf16.msra.mxu0 0
    %148 = vmatpush.bf16.msra.mxu0 0
    %149 = vmatpush.bf16.msra.mxu0 0
    %150 = vmatpush.bf16.msra.mxu0 0
    %151 = vmatpush.bf16.msra.mxu0 0
    %152 = vmatpush.bf16.msra.mxu0 0
    %153 = vmatpush.bf16.msra.mxu0 %v140
    %154 = vmatpush.bf16.msra.mxu0 %v139
    %155 = vmatmul.bf16.gmra.mxu0 %v145
    %v156 = vpop.f32.mrf.mxu0
    %v157 = vadd.f32 %v129, %v156
    %v158 = vpop.f32.mrf.mxu0
    %159 = vdwg.mxu0
    %v160 = vmul.f32 %v157, 0.5
    %v161 = vmul.f32 %v157, 0.044715
    %v162 = vmul.f32 %v161, %v157
    %v163 = vmul.f32 %v162, %v157
    %v164 = vadd.f32 %v157, %v163
    %v165 = vmul.f32 %v164, 0.7978846
    %v166 = vtanh.pop %v165
    %v167 = vadd.f32 %v166, 1.0
    %v168 = vmul.f32 %v160, %v167
    %v169 = vld [vmem:[#allocation4] sm:$0x3]
    %v170 = vpack.c.bf16 %v168, %v168
    %v171 = vld [vmem:[%s7] sm:$0xf]
    %v172 = vld [vmem:[%s7 + $0x4] sm:$0xf]
    %v173 = vld [vmem:[%s7 + $0x8] sm:$0xf]
    %v174 = vld [vmem:[%s7 + $0xc] sm:$0xf]
    %v175 = vld [vmem:[%s7 + $0x10] sm:$0xf]
    %v176 = vld [vmem:[%s7 + $0x14] sm:$0xf]
    %v177 = vld [vmem:[%s7 + $0x18] sm:$0xf]
    %v178 = vld [vmem:[%s7 + $0x1c] sm:$0xf]
    %v187 = vunpack.c.l.b16 %v171
    %v188 = vunpack.c.l.b16 %v172
    %v189 = vunpack.c.l.b16 %v173
    %v190 = vunpack.c.l.b16 %v174
    %v191 = vunpack.c.l.b16 %v175
    %v192 = vunpack.c.l.b16 %v176
    %v193 = vunpack.c.l.b16 %v177
    %v194 = vunpack.c.l.b16 %v178
    %v195 = vpack.c.b16 %v188, %v187
    %v196 = vpack.c.b16 %v190, %v189
    %v197 = vpack.c.b16 %v192, %v191
    %v198 = vpack.c.b16 %v194, %v193
    %vm203 = vcmask 523264
    %v205 = vsel %vm203, %v170, 0
    %207 = vmatpush.bf16.msra.mxu0 0
    %208 = vmatpush.bf16.msra.mxu0 0
    %209 = vmatpush.bf16.msra.mxu0 0
    %210 = vmatpush.bf16.msra.mxu0 0
    %211 = vmatpush.bf16.msra.mxu0 %v198
    %212 = vmatpush.bf16.msra.mxu0 %v197
    %213 = vmatpush.bf16.msra.mxu0 %v196
    %214 = vmatpush.bf16.msra.mxu0 %v195
    %215 = vmatmul.bf16.gmra.mxu0 %v205
    %v216 = vpop.f32.mrf.mxu0
    %v217 = vadd.f32 0.0, %v216
    %v218 = vpop.f32.mrf.mxu0
    %219 = vdwg.mxu0
    %v220 = vadd.f32 %v169, %v217
    %vm221 = vcmask 254976
    %222 = vst.msk [vmem:[#allocation4] sm:$0x3] %vm221, %v220
    // Predicated region
    $region42: #{siglip_mha_pooling_head.3} parent=1 // pred_check
      %p223 = pneg %p34
    $region43: #{siglip_mha_pooling_head.3} parent=1 // pred_check_branch
      %225 = sbr.rel (%p223) target = $region45
    $region44: #{siglip_mha_pooling_head.3} parent=1 // pred_region
      %v226 = vld [vmem:[#allocation3] sm:$0x3]
      %v227 = vld [vmem:[#allocation4] sm:$0x3]
      %v228 = vadd.f32 %v226, %v227
      %v229 = vld [vmem:[%s8] sm:$0x1]
      %v231 = vperm.slane %v229, 0
      %v233 = vadd.f32 %v228, %v231
      %234 = vst.msk [vmem:[#allocation5] sm:$0x3] %vm221, %v233
    $region45: #{siglip_mha_pooling_head.3} parent=1 // pred_fallthru
      _
    // Predicated region
    $region46: #{siglip_mha_pooling_head.3} parent=1 // pred_check
      _
    $region47: #{siglip_mha_pooling_head.3} parent=1 // pred_check_branch
      %236 = sbr.rel (0) target = $region49
    $region48: #{siglip_mha_pooling_head.3} parent=1 // pred_region
      %238 = vsyncadd [#allocation6], 0
      %s240 = sshll.u32 [#allocation5], 4
      %s241 = int_to_ptr.vmem [resolvable:$true] %s240
      %s242 = sshll.u32 %s9, 4
      %s243 = int_to_ptr.hbm [resolvable:$true] %s242
      %245 = dma.vmem_to_hbm [thread:$0]  %s241, 32, %s243, [#allocation6]
    $region49: #{siglip_mha_pooling_head.3} parent=1 // pred_fallthru
      _
    // Predicated region
    $region50: #{siglip_mha_pooling_head.3} parent=1 // pred_check
      _
    $region51: #{siglip_mha_pooling_head.3} parent=1 // pred_check_branch
      %247 = sbr.rel (0) target = $region53
    $region52: #{siglip_mha_pooling_head.3} parent=1 // pred_region
      %249 = dma.done [#allocation6], 32
    $region53: #{siglip_mha_pooling_head.3} parent=1 // pred_fallthru
      _
    %250 = vsyncpa [#allocation6], 1

</llo_original>
